<compile_context>
chip_gen: v7x
topology: tpu7x:2x2x1
jax: 0.10.0
libtpu: 0.0.40
codegen_flags: <defaults>
</compile_context>

<pallas_src>
import math
import functools

import jax
import jax.numpy as jnp
from jax import lax
from jax.experimental import pallas as pl
from jax.experimental.pallas import tpu as pltpu

LANE = 128
ROW_TILE = 8                      # f32 sublane tile; reduction accumulator shape
ROW_ALIGN = 16                    # sublane alignment covering f32 (8) and bf16/f16 (16)
BLOCK_BYTES = 4 * 1024 * 1024     # per-block byte budget (dtype-independent DMA size)
VMEM_LIMIT = 48 * 1024 * 1024     # explicit scoped-VMEM cap; <= physical on every gen

_NATIVE_DTYPES = (jnp.float32, jnp.bfloat16, jnp.float16)


def _round_up(a, b):
    return ((a + b - 1) // b) * b


# ----------------------------------------------------------------------------
# data shaping: flatten to a lane-dense 2D slab (copy-free in the common case)
# ----------------------------------------------------------------------------
def _prep_2d(x):
    """Returns (x2d, rows_padded, block_rows, nblocks, n_valid, work_dtype).

    A pad copy happens only when the element count is not a multiple of 128 or
    when the whole tensor is smaller than one block and needs sublane
    alignment; large 128-divisible tensors are pure reshapes.
    """
    orig_dtype = x.dtype
    work_dtype = orig_dtype if any(orig_dtype == d for d in _NATIVE_DTYPES) else jnp.float32
    flat = x.reshape(-1)
    if work_dtype != orig_dtype:
        flat = flat.astype(work_dtype)
    n = flat.shape[0]
    rows = -(-n // LANE)

    # Byte-budgeted block: 8192 rows for f32, 16384 for bf16/f16 (always 4 MiB).
    max_block_rows = BLOCK_BYTES // (LANE * jnp.dtype(work_dtype).itemsize)
    if rows >= max_block_rows:
        # Big tensors: fixed 4 MiB blocks; ragged row tail handled via a partial
        # final block (reductions mask it in-kernel), so no full-array pad copy.
        block_rows = max_block_rows
        rows_padded = rows
    else:
        # Small tensors: one full, tile-aligned block (tiny pad at most).
        block_rows = _round_up(max(rows, ROW_ALIGN), ROW_ALIGN)
        rows_padded = block_rows

    n_padded = rows_padded * LANE
    if n_padded != n:
        flat = jnp.pad(flat, (0, n_padded - n))   # zero pad (rare path)
    x2d = flat.reshape(rows_padded, LANE)
    nblocks = -(-rows_padded // block_rows)
    return x2d, rows_padded, block_rows, nblocks, n, work_dtype


# ----------------------------------------------------------------------------
# kernel 1: max(|x|) reduction  (VPU-only hot loop, (8,128) resident accumulator)
# ----------------------------------------------------------------------------
def _max_abs_kernel(x_ref, o_ref, *, total_rows, block_rows, blocks_per_core,
                    mask_start):
    c = pl.program_id(0)
    i = pl.program_id(1)
    gidx = c * blocks_per_core + i

    @pl.when(i == 0)
    def _():
        o_ref[...] = jnp.zeros_like(o_ref)

    a = jnp.abs(x_ref[...].astype(jnp.float32))            # (block_rows, 128)

    if mask_start is None:
        # No ragged tail and no duplicated steps: unmasked everywhere.
        o_ref[...] = jnp.maximum(o_ref[...], jnp.max(a, axis=0, keepdims=True))
    else:
        @pl.when(gidx < mask_start)                         # hot path: no iota/where
        def _():
            o_ref[...] = jnp.maximum(o_ref[...], jnp.max(a, axis=0, keepdims=True))

        @pl.when(gidx >= mask_start)                        # last partial / duplicated block
        def _():
            rid = gidx * block_rows + lax.broadcasted_iota(jnp.int32, a.shape, 0)
            am = jnp.where(rid < total_rows, a, 0.0)
            o_ref[...] = jnp.maximum(o_ref[...], jnp.max(am, axis=0, keepdims=True))


# ----------------------------------------------------------------------------
# kernel 2: count(|x| >= threshold); threshold prefetched into SMEM, exact int32 acc
# ----------------------------------------------------------------------------
def _count_ge_kernel(thr_ref, x_ref, o_ref, *, total_rows, block_rows,
                     blocks_per_core, mask_start):
    c = pl.program_id(0)
    i = pl.program_id(1)
    gidx = c * blocks_per_core + i

    @pl.when(i == 0)
    def _():
        o_ref[...] = jnp.zeros_like(o_ref)

    thr = thr_ref[0]
    a = jnp.abs(x_ref[...].astype(jnp.float32))

    def _accum(keep):
        # Per-block count per lane <= block_rows (<= 16384) so the f32 partial
        # sum is exact; cross-block accumulation is exact int32.
        cnt = jnp.sum(keep.astype(jnp.float32), axis=0, keepdims=True).astype(jnp.int32)
        o_ref[...] = o_ref[...] + cnt   # every sublane row carries identical totals

    if mask_start is None:
        _accum(a >= thr)
    else:
        @pl.when(gidx < mask_start)                         # hot path: no iota/where
        def _():
            _accum(a >= thr)

        @pl.when(gidx >= mask_start)                        # last partial / duplicated block
        def _():
            rid = gidx * block_rows + lax.broadcasted_iota(jnp.int32, a.shape, 0)
            _accum(jnp.logical_and(a >= thr, rid < total_rows))


def _run_reduction(kernel, x, scalar_args, out_dtype):
    x2d, rows_p, block_rows, nblocks, _, _ = _prep_2d(x)

    # Leading "parallel" axis: lets multi-TensorCore chips split the HBM stream;
    # on single-core chips it just iterates serially (correct either way).
    ncores = 2 if nblocks >= 2 else 1
    bpc = -(-nblocks // ncores)
    tail_ragged = (rows_p % block_rows) != 0

    # First global block index that needs masking; None = masking never needed.
    mask_start = nblocks - 1 if tail_ragged else nblocks
    if mask_start >= ncores * bpc:
        mask_start = None

    kern = functools.partial(kernel, total_rows=rows_p, block_rows=block_rows,
                             blocks_per_core=bpc, mask_start=mask_start)

    if ncores * bpc > nblocks:
        # Clamp duplicated trailing grid steps onto the last real block so their
        # DMA stays in bounds; the kernel masks them to a no-op.
        def in_map(c, i, *_):
            return (jnp.minimum(c * bpc + i, nblocks - 1), 0)
    else:
        def in_map(c, i, *_):
            return (c * bpc + i, 0)

    def out_map(c, i, *_):
        return (c, 0)

    out = pl.pallas_call(
        kern,
        out_shape=jax.ShapeDtypeStruct((ncores * ROW_TILE, LANE), out_dtype),
        grid_spec=pltpu.PrefetchScalarGridSpec(
            num_scalar_prefetch=len(scalar_args),
            grid=(ncores, bpc),
            in_specs=[pl.BlockSpec((block_rows, LANE), in_map)],
            out_specs=pl.BlockSpec((ROW_TILE, LANE), out_map),
        ),
        compiler_params=pltpu.CompilerParams(
            dimension_semantics=("parallel", "arbitrary"),
            vmem_limit_bytes=VMEM_LIMIT),
    )(*scalar_args, x2d)
    return out, ncores


def max_abs_pallas(x):
    out, _ = _run_reduction(_max_abs_kernel, x, scalar_args=(), out_dtype=jnp.float32)
    return jnp.max(out)


def count_ge_pallas(x, threshold):
    thr = jnp.asarray([float(threshold)], jnp.float32)
    out, ncores = _run_reduction(_count_ge_kernel, x, scalar_args=(thr,),
                                 out_dtype=jnp.int32)
    per_core = out.reshape(ncores, ROW_TILE, LANE)[:, 0, :]  # rows are duplicates
    return jnp.sum(per_core)


# ----------------------------------------------------------------------------
# kernel 3: elementwise linear quantization (native dtype in/out, f32 in-register)
# ----------------------------------------------------------------------------
def _quantize_kernel(x_ref, o_ref, *, inv_delta, delta, min_val, max_val):
    x = x_ref[...].astype(jnp.float32)
    rounded = jnp.floor(x * inv_delta + 0.5)      # delta is a power of two -> bit-exact vs /delta
    o_ref[...] = (jnp.clip(rounded, min_val, max_val) * delta).astype(o_ref.dtype)


def _sign_minus_one_kernel(x_ref, o_ref):
    x = x_ref[...].astype(jnp.float32)
    o_ref[...] = (jnp.sign(x) - 1.0).astype(o_ref.dtype)


def _run_elementwise(kernel, x):
    orig_shape, orig_dtype = x.shape, x.dtype
    x2d, rows_p, block_rows, nblocks, n, work_dtype = _prep_2d(x)
    # TODO(synk): on v7x a leading CORE_PARALLEL axis (or pl.core_map) would split
    # this stream across both TensorCores; kept 1-D "parallel" for portability.
    out2d = pl.pallas_call(
        kernel,
        out_shape=jax.ShapeDtypeStruct((rows_p, LANE), work_dtype),
        grid_spec=pltpu.PrefetchScalarGridSpec(
            num_scalar_prefetch=0,
            grid=(nblocks,),
            in_specs=[pl.BlockSpec((block_rows, LANE), lambda i: (i, 0))],
            out_specs=pl.BlockSpec((block_rows, LANE), lambda i: (i, 0)),
        ),
        compiler_params=pltpu.CompilerParams(
            dimension_semantics=("parallel",),
            vmem_limit_bytes=VMEM_LIMIT),
    )(x2d)
    out = out2d.reshape(-1)
    if out.shape[0] != n:
        out = out[:n]   # TODO(synk): rare lane-ragged path still pays a pad + slice copy
    return out.reshape(orig_shape).astype(orig_dtype)


# ----------------------------------------------------------------------------
# module-level semantics (mirrors the PyTorch code; sf/bits stay host scalars)
# ----------------------------------------------------------------------------
def compute_integral_part(x, overflow_rate):
    n = int(x.size)
    split_idx = int(overflow_rate * n)
    if split_idx != 0:
        # TODO(synk): overflow_rate > 0 needs a global sort / top-k to pick the
        # split value; only the overflow_rate == 0 path (max |x|) is implemented
        # as a Pallas reduction.
        raise NotImplementedError("overflow_rate > 0 not supported")
    v = float(max_abs_pallas(x))
    if v < 1:
        return 0
    si = math.ceil(math.log(v + 1e-12, 2))
    threshold = 2 ** (si - 1)
    # TODO(synk): the max and count passes could be fused into one HBM read via an
    # exponent histogram; kept as two passes because the threshold depends on
    # max|x| and the si math must stay in host float64 to match the reference.
    ratio = float(count_ge_pallas(x, threshold)) / n
    if ratio < 0.01:
        si = si - 1
    return si


def linear_quantize(x, sf, bits):
    if sf < 0:
        sf = 0
    assert bits >= 1, bits
    if bits == 1:
        return _run_elementwise(_sign_minus_one_kernel, x)
    delta = math.pow(2.0, -sf)
    inv_delta = math.pow(2.0, sf)       # exact reciprocal (power of two)
    bound = math.pow(2.0, bits - 1)
    kernel = functools.partial(_quantize_kernel, inv_delta=inv_delta, delta=delta,
                               min_val=-bound, max_val=bound - 1.0)
    return _run_elementwise(kernel, x)


class LinearQuant:
    def __init__(self, name, bits, sf=None, overflow_rate=0.0, counter=10):
        self.name = name
        self._counter = counter
        self.bits = bits
        self.sf = sf
        self.overflow_rate = overflow_rate

    @property
    def counter(self):
        return self._counter

    def forward(self, x):
        if self._counter > 0:
            self._counter -= 1
            sf_new = self.bits - 1 - compute_integral_part(x, self.overflow_rate)
            self.sf = min(self.sf, sf_new) if self.sf is not None else sf_new
            self.sf = max(self.sf, 0)
            return x
        else:
            return linear_quantize(x, self.sf, self.bits)

    def __repr__(self):
        return "{}(sf={}, bits={}, overflow_rate={:.3f}, counter={})".format(
            self.__class__.__name__, self.sf, self.bits, self.overflow_rate,
            self.counter)


# ----------------------------------------------------------------------------
if __name__ == "__main__":
    k1, k2, k3, k4 = jax.random.split(jax.random.PRNGKey(0), 4)

    def _ref_linear_quantize(x, sf, bits):
        if sf < 0:
            sf = 0
        if bits == 1:
            return jnp.sign(x) - 1.0
        delta = 2.0 ** (-sf)
        bound = 2.0 ** (bits - 1)
        return jnp.clip(jnp.floor(x / delta + 0.5), -bound, bound - 1.0) * delta

    def _ref_compute_integral_part(x):
        v = float(jnp.max(jnp.abs(x)))
        if v < 1:
            return 0
        si = math.ceil(math.log(v + 1e-12, 2))
        threshold = 2 ** (si - 1)
        ratio = float(jnp.sum(jnp.abs(x) >= threshold)) / int(x.size)
        if ratio < 0.01:
            si -= 1
        return si

    # --- small NCHW activation matching the PyTorch layout (N=2, C=4, 16x16) ---
    x = jax.random.normal(k1, (2, 4, 16, 16), dtype=jnp.float32) * 3.0

    quant = LinearQuant("act_quant", bits=8, sf=None, overflow_rate=0.0, counter=1)
    y_cal = jax.block_until_ready(quant.forward(x))      # calibration pass-through
    assert jnp.allclose(y_cal, x), "calibration step must pass input through"
    assert quant._counter == 0 and quant.sf is not None
    assert quant.sf == max(0, 8 - 1 - _ref_compute_integral_part(x)), "sf mismatch"

    y_q = jax.block_until_ready(quant.forward(x))        # Pallas quantize
    y_ref = _ref_linear_quantize(x, quant.sf, quant.bits)
    assert y_q.shape == x.shape and y_q.dtype == x.dtype
    assert jnp.allclose(y_q, y_ref, atol=1e-6), "Pallas quantize mismatch"

    # --- bits == 1 path ---
    y1 = jax.block_until_ready(linear_quantize(x, 0, 1))
    assert jnp.allclose(y1, jnp.sign(x) - 1.0), "bits==1 path mismatch"

    # --- larger tensor: exercises multi-block grid, ragged row tail with the
    #     pl.when-gated masking, and the 2-way core split with an odd block
    #     count (clamped duplicated grid step) ---
    xb = jax.random.normal(k2, (2, 4, 1026, 512), dtype=jnp.float32) * 4.0
    qb = LinearQuant("act_quant_b", bits=6, sf=None, overflow_rate=0.0, counter=1)
    _ = jax.block_until_ready(qb.forward(xb))
    assert qb.sf == max(0, 6 - 1 - _ref_compute_integral_part(xb)), "large sf mismatch"
    yb = jax.block_until_ready(qb.forward(xb))
    yb_ref = _ref_linear_quantize(xb, qb.sf, qb.bits)
    assert jnp.allclose(yb, yb_ref, atol=1e-6), "large quantize mismatch"

    # --- bf16 input: exercises byte-based block sizing + in-kernel dtype convert ---
    xh = (jax.random.normal(k4, (2, 4, 16, 16), dtype=jnp.float32) * 3.0).astype(jnp.bfloat16)
    yh = jax.block_until_ready(linear_quantize(xh, 3, 8))
    yh_ref = _ref_linear_quantize(xh.astype(jnp.float32), 3, 8).astype(jnp.bfloat16)
    assert yh.dtype == jnp.bfloat16
    assert jnp.allclose(yh.astype(jnp.float32), yh_ref.astype(jnp.float32), atol=1e-6), \
        "bf16 quantize mismatch"

    # --- ragged tensor (n not a multiple of 128): exercises the pad/slice path ---
    xr = jax.random.normal(k3, (3, 5, 7), dtype=jnp.float32) * 2.0
    yr = jax.block_until_ready(linear_quantize(xr, 4, 8))
    yr_ref = _ref_linear_quantize(xr, 4, 8)
    assert yr.shape == xr.shape and jnp.allclose(yr, yr_ref, atol=1e-6), "ragged mismatch"

    print("KERNEL_OK")
</pallas_src>

<mosaic_0001>
module attributes {stable_mosaic.version = 11 : i64} {
  func.func @_max_abs_kernel(%arg0: i32, %arg1: i32, %arg2: memref<16x128xf32, #tpu.memory_space<vmem>>, %arg3: memref<8x128xf32, #tpu.memory_space<vmem>>) attributes {dimension_semantics = [#tpu.dimension_semantics<parallel>, #tpu.dimension_semantics<arbitrary>], iteration_bounds = array<i64: 1, 1>, scalar_prefetch = 0 : i64, scratch_operands = 0 : i64, tpu.core_type = #tpu.core_type<tc>, window_params = [{transform_indices = @transform_0, window_bounds = array<i64: 16, 128>}, {transform_indices = @transform_1, window_bounds = array<i64: 8, 128>}]} {
    %c0_i32 = arith.constant 0 : i32
    %0 = arith.cmpi eq, %arg1, %c0_i32 : i32
    %1 = arith.extui %0 : i1 to i32
    %c0_i32_0 = arith.constant 0 : i32
    %2 = arith.cmpi ne, %1, %c0_i32_0 : i32
    scf.if %2 {
      %cst_6 = arith.constant 0.000000e+00 : f32
      %11 = vector.broadcast %cst_6 : f32 to vector<8x128xf32>
      %c0_7 = arith.constant 0 : index
      %c0_8 = arith.constant 0 : index
      %12 = vector.load %arg3[%c0_7, %c0_8] : memref<8x128xf32, #tpu.memory_space<vmem>>, vector<8x128xf32>
      tpu.vector_store %arg3[%c0_7, %c0_8], %11 {strides = array<i32>} : memref<8x128xf32, #tpu.memory_space<vmem>>, vector<8x128xf32>,
    } else {
    }
    %c0 = arith.constant 0 : index
    %c0_1 = arith.constant 0 : index
    %3 = vector.load %arg2[%c0, %c0_1] : memref<16x128xf32, #tpu.memory_space<vmem>>, vector<16x128xf32>
    %4 = math.absf %3 : vector<16x128xf32>
    %c0_2 = arith.constant 0 : index
    %c0_3 = arith.constant 0 : index
    %5 = vector.load %arg3[%c0_2, %c0_3] : memref<8x128xf32, #tpu.memory_space<vmem>>, vector<8x128xf32>
    %cst = arith.constant dense<0xFF800000> : vector<128xf32>
    %6 = vector.multi_reduction <maximumf>, %4, %cst [0] : vector<16x128xf32> to vector<128xf32>
    %7 = vector.shape_cast %6 : vector<128xf32> to vector<1x128xf32>
    %8 = vector.broadcast %7 : vector<1x128xf32> to vector<8x128xf32>
    %9 = arith.maximumf %5, %8 : vector<8x128xf32>
    %c0_4 = arith.constant 0 : index
    %c0_5 = arith.constant 0 : index
    %10 = vector.load %arg3[%c0_4, %c0_5] : memref<8x128xf32, #tpu.memory_space<vmem>>, vector<8x128xf32>
    tpu.vector_store %arg3[%c0_4, %c0_5], %9 {strides = array<i32>} : memref<8x128xf32, #tpu.memory_space<vmem>>, vector<8x128xf32>,
    return
  }
  func.func @transform_0(%arg0: i32, %arg1: i32) -> (i32, i32) {
    %c1_i32 = arith.constant 1 : i32
    %0 = arith.muli %arg0, %c1_i32 : i32
    %1 = arith.addi %0, %arg1 : i32
    %c0_i32 = arith.constant 0 : i32
    %c0_i32_0 = arith.constant 0 : i32
    return %1, %c0_i32 : i32, i32
  }
  func.func @transform_1(%arg0: i32, %arg1: i32) -> (i32, i32) {
    %c0_i32 = arith.constant 0 : i32
    %c0_i32_0 = arith.constant 0 : i32
    return %arg0, %c0_i32 : i32, i32
  }
}

</mosaic_0001>

<llo_original>
// kernel: tpu_custom_call.1
$region0: #{tpu_custom_call.1}
  #allocation0 [shape = 'u32[]', space=smem, size = 0x4, offset = 0x4, fixed_abs, tag = 'smem constant byte address 0x4 - core index']
  #allocation1 [shape = 'u32[144,128]{1,0:T(1,128)}', space=vmem, size = 0x12000, scoped, tag = 'internal scratch']
  %s0 = inlined_call_operand.hbm [shape: f32[16,128], index: 0, kind: input, shape index: {}]
  %s1 = inlined_call_operand.hbm [shape: f32[8,128], index: 1, kind: output, shape index: {}]
  %s2 = sld [smem:[#allocation0]]
  $region22: #{tpu_custom_call.1} parent=0
    _
  %s4 = ssub.s32 1, %s2
  %s5 = scalar_select 0, %s4, %s2
  $region1: #{tpu_custom_call.1} parent=0
    #allocation2 [shape = 'u8[8192]{0}', space=vmem, size = 0x2000, scoped, tag = 'input window, operand 0, single buffered']
    #allocation3 [shape = 's32[1]{0}', space=sflag, size = 0x4, scoped, tag = 'scoped memory for tpu_custom_call.1']
    #allocation4 [shape = 's32[1]{0}', space=sflag, size = 0x4, scoped, tag = 'scoped memory for tpu_custom_call.1']
    #allocation5 [shape = 'u8[4096]{0}', space=vmem, size = 0x1000, scoped, tag = 'output window, operand 0, single buffered']
    %6 = vsyncpa [#allocation3], 0
    %7 = vsyncpa [#allocation4], 0
    // Predicated region
    $region2: #{tpu_custom_call.1} parent=1 // pred_check
      _
    $region3: #{tpu_custom_call.1} parent=1 // pred_check_branch
      %9 = sbr.rel (0) target = $region5
    $region4: #{tpu_custom_call.1} parent=1 // pred_region
      %s10 = sadd.s32 0, 0
      %s11 = smul.u32 2, %s10
      %s13 = ssub.s32 256, 256
      %14 = vsyncadd [#allocation3], %s13
      %s15 = smul.addr %s11, 128
      %s16 = scalar_lea.hbm %s0, %s15
      %s17 = sshll.u32 [#allocation2], 4
      %s18 = int_to_ptr.vmem [resolvable:$true] %s17
      %23 = dma.hbm_to_vmem [thread:$0]  %s16, 256, %s18, [#allocation3], 128, 128, 8
    $region5: #{tpu_custom_call.1} parent=1 // pred_fallthru
      _
    // Predicated region
    $region6: #{tpu_custom_call.1} parent=1 // pred_check
      _
    $region7: #{tpu_custom_call.1} parent=1 // pred_check_branch
      %25 = sbr.rel (0) target = $region9
    $region8: #{tpu_custom_call.1} parent=1 // pred_region
      %26 = dma.done [#allocation3], 256
    $region9: #{tpu_custom_call.1} parent=1 // pred_fallthru
      _
    %s27 = sadd.s32 0, 0
    %s28 = smul.u32 2, %s27
    %p29 = scmp.eq.s32.totalorder 0, 0
    // Predicated region
    $region10: #{tpu_custom_call.1} parent=1 // pred_check
      %p30 = pneg %p29
    $region11: #{tpu_custom_call.1} parent=1 // pred_check_branch
      %32 = sbr.rel (%p30) target = $region13
    $region12: #{tpu_custom_call.1} parent=1 // pred_region
      %33 = vst [vmem:[#allocation5] sm:$0xff] 0.0
    $region13: #{tpu_custom_call.1} parent=1 // pred_fallthru
      _
    %v34 = vld [vmem:[#allocation2] sm:$0xff]
    %v35 = vld [vmem:[#allocation2 + $0x8] sm:$0xff]
    %v36 = vand.u32 2147483647, %v34
    %v37 = vand.u32 2147483647, %v35
    %v38 = vld [vmem:[#allocation5] sm:$0xff]
    %v39 = vmax.f32 %v36, %v37
    %v40 = vrot.slane %v39, 4
    %v41 = vmax.f32 %v39, %v40
    %v42 = vrot.slane %v41, 2
    %v43 = vmax.f32 %v41, %v42
    %v44 = vrot.slane %v43, 1
    %v45 = vmax.f32 %v43, %v44
    %v46 = vmax.f32 %v38, %v45
    %47 = vst [vmem:[#allocation5] sm:$0xff] %v46
    // Predicated region
    $region14: #{tpu_custom_call.1} parent=1 // pred_check
      _
    $region15: #{tpu_custom_call.1} parent=1 // pred_check_branch
      %49 = sbr.rel (0) target = $region17
    $region16: #{tpu_custom_call.1} parent=1 // pred_region
      %s51 = ssub.s32 128, 128
      %52 = vsyncadd [#allocation4], %s51
      %s54 = sshll.u32 [#allocation5], 4
      %s55 = int_to_ptr.vmem [resolvable:$true] %s54
      %57 = dma.vmem_to_hbm [thread:$0]  %s55, 128, %s1, [#allocation4]
    $region17: #{tpu_custom_call.1} parent=1 // pred_fallthru
      _
    // Predicated region
    $region18: #{tpu_custom_call.1} parent=1 // pred_check
      _
    $region19: #{tpu_custom_call.1} parent=1 // pred_check_branch
      %59 = sbr.rel (0) target = $region21
    $region20: #{tpu_custom_call.1} parent=1 // pred_region
      %60 = dma.done [#allocation4], 128
    $region21: #{tpu_custom_call.1} parent=1 // pred_fallthru
      _
    %61 = vsyncpa [#allocation3], 1
    %62 = vsyncpa [#allocation4], 1

</llo_original>
